<compile_context>
chip_gen: v7x
topology: tpu7x:2x2x1
jax: 0.10.0
libtpu: 0.0.40
codegen_flags: <defaults>
</compile_context>

<pallas_src>
import functools

import jax
import jax.numpy as jnp
import numpy as np
from jax.experimental import pallas as pl
from jax.experimental.pallas import tpu as pltpu

LANE = 128      # TPU lane width (last-dim tile)
SUBLANE = 8     # f32 sublane tile (second-to-last-dim tile)


def _round_up(x, m):
    return ((x + m - 1) // m) * m


def _conv_gemm_kernel(x_ref, w_ref, b_ref, o_ref):
    """Whole conv as one lane-dense MXU matmul.

    x_ref: (N*Ho_p, K_pad)  row-im2col input rows (K = KH*W*Cin).
    w_ref: (K_pad, 128)     banded filter; column m = wo * Cout + co.
    b_ref: (1, 128)         bias row, broadcast over M.
    o_ref: (N*Ho_p, 128)    lane-dense output slab.
    """
    acc = jnp.dot(x_ref[...], w_ref[...], preferred_element_type=jnp.float32)
    o_ref[...] = (acc + b_ref[...]).astype(o_ref.dtype)


def _pack_weights(weight_oihw, bias, *, w_in, wo):
    """Fold the Conv2d filter into ONE banded (K_pad, 128) matrix (done once).

    Row index  j = (kh * W + w') * Cin + ci   (w' = input column)
    Col index  m = wo * Cout + co             (lane-dense output layout)
    banded[j, m] = weight[co, ci, kh, w' - wo]  whenever 0 <= w' - wo < KW.
    Bias goes into a separate (1, 128) row (no ones column in the input).
    NOTE: numpy packing -> parameters must be concrete (not traced); packing
    is cached per input width, outside the jit/hot path.
    """
    c_out, c_in, kh_sz, kw_sz = weight_oihw.shape
    w_np = np.asarray(weight_oihw, np.float32)
    b_np = np.asarray(bias, np.float32)

    k_pad = _round_up(kh_sz * w_in * c_in, SUBLANE)   # 3*16*3 = 144 (already /8)
    m_pad = _round_up(wo * c_out, LANE)               # 14*6    -> 128

    banded = np.zeros((k_pad, m_pad), np.float32)
    for kh in range(kh_sz):
        for kw in range(kw_sz):
            for ci in range(c_in):
                for wo_i in range(wo):
                    j = (kh * w_in + wo_i + kw) * c_in + ci
                    banded[j, wo_i * c_out:(wo_i + 1) * c_out] = \
                        w_np[:, ci, kh, kw]

    bias_row = np.zeros((1, m_pad), np.float32)
    bias_row[0, :wo * c_out] = np.tile(b_np, wo)
    return jnp.asarray(banded), jnp.asarray(bias_row)


def conv2d_valid_pallas(x_nchw, banded_w, bias_row, *, kh_sz, kw_sz, c_out):
    """x_nchw: (N, Cin, H, W); banded_w/bias_row from _pack_weights."""
    n, c_in, h, w = x_nchw.shape
    ho, wo = h - kh_sz + 1, w - kw_sz + 1
    ho_p = _round_up(ho, SUBLANE)                     # 8-aligned output rows
    h_p = ho_p + kh_sz - 1
    k_pad, m_pad = banded_w.shape
    k_raw = kh_sz * w * c_in

    # Wrapper-side layout plumbing only (tiny tensors; fuses into a couple of
    # XLA fusions): NCHW -> NHWC row matrix -> full row-im2col with
    # K = KH*W*Cin.  All weight/bias prep is hoisted into _pack_weights.
    rows = jnp.transpose(x_nchw, (0, 2, 3, 1)).reshape(n, h, w * c_in)
    rows = jnp.pad(rows, ((0, 0), (0, h_p - h), (0, 0)))
    x_rows = jnp.concatenate(
        [rows[:, kh:kh + ho_p, :] for kh in range(kh_sz)], axis=-1)
    if k_pad != k_raw:
        x_rows = jnp.pad(x_rows, ((0, 0), (0, 0), (0, k_pad - k_raw)))
    x_rows = x_rows.reshape(n * ho_p, k_pad)          # (32, 144)

    # Gridless call: single block, everything resident in VMEM, one matmul.
    y = pl.pallas_call(
        _conv_gemm_kernel,
        out_shape=jax.ShapeDtypeStruct((n * ho_p, m_pad), jnp.float32),
        in_specs=[
            pl.BlockSpec(memory_space=pltpu.MemorySpace.VMEM),
            pl.BlockSpec(memory_space=pltpu.MemorySpace.VMEM),
            pl.BlockSpec(memory_space=pltpu.MemorySpace.VMEM),
        ],
        out_specs=pl.BlockSpec(memory_space=pltpu.MemorySpace.VMEM),
    )(x_rows, banded_w, bias_row)

    # Un-plumb the lane-dense slab: (N*Ho_p, 128) -> (N, Cout, Ho, Wo).
    y = y.reshape(n, ho_p, m_pad)[:, :ho, :wo * c_out]
    y = y.reshape(n, ho, wo, c_out)
    return jnp.transpose(y, (0, 3, 1, 2)).astype(x_nchw.dtype)


class YinKangPallas:
    """JAX/Pallas equivalent of the PyTorch `YinKang` module."""

    def __init__(self, key):
        c_in, c_out, k = 3, 6, 3
        self.c_in, self.c_out, self.k = c_in, c_out, k
        wkey, bkey = jax.random.split(key)
        fan_in = c_in * k * k
        bound = 1.0 / np.sqrt(fan_in)
        # PyTorch layouts: weight (Cout, Cin, KH, KW), bias (Cout,).
        self.weight_oihw = jax.random.uniform(
            wkey, (c_out, c_in, k, k), jnp.float32, -bound, bound)
        self.bias = jax.random.uniform(
            bkey, (c_out,), jnp.float32, -bound, bound)
        # Banded packing depends on the input width; build once per spatial
        # shape and cache (keyed on w_in; parameters are fixed at init).
        # NOTE: banded weight grows O(W^2 * Cin * Cout) -- fine at W=16
        # (~72 KB); switch to a tiled-over-wo scheme for large widths.
        self._packed = {}

    def _banded(self, w_in):
        if w_in not in self._packed:
            self._packed[w_in] = _pack_weights(
                self.weight_oihw, self.bias,
                w_in=w_in, wo=w_in - self.k + 1)
        return self._packed[w_in]

    def __call__(self, x_nchw):
        banded_w, bias_row = self._banded(x_nchw.shape[3])
        return conv2d_valid_pallas(
            x_nchw, banded_w, bias_row,
            kh_sz=self.k, kw_sz=self.k, c_out=self.c_out)


def _reference_conv_nchw(x_nchw, weight_oihw, bias):
    """Pure-JAX reference (matches torch.nn.Conv2d semantics)."""
    y = jax.lax.conv_general_dilated(
        x_nchw, weight_oihw,
        window_strides=(1, 1), padding="VALID",
        dimension_numbers=("NCHW", "OIHW", "NCHW"))
    return y + bias[None, :, None, None]


if __name__ == "__main__":
    key = jax.random.PRNGKey(0)
    xkey, pkey = jax.random.split(key)

    # Small shapes consistent with the module: batch=2, Cin=3, spatial=16.
    x = jax.random.normal(xkey, (2, 3, 16, 16), jnp.float32)

    model = YinKangPallas(pkey)
    y = jax.block_until_ready(model(x))
    assert y.shape == (2, 6, 14, 14), y.shape

    y_ref = _reference_conv_nchw(x, model.weight_oihw, model.bias)
    np.testing.assert_allclose(np.asarray(y), np.asarray(y_ref),
                               rtol=1e-4, atol=1e-5)

    print("KERNEL_OK")
</pallas_src>

<mosaic_0001>
module attributes {stable_mosaic.version = 11 : i64} {
  func.func @_conv_gemm_kernel(%arg0: memref<32x144xf32, #tpu.memory_space<vmem>>, %arg1: memref<144x128xf32, #tpu.memory_space<vmem>>, %arg2: memref<1x128xf32, #tpu.memory_space<vmem>>, %arg3: memref<32x128xf32, #tpu.memory_space<vmem>>) attributes {dimension_semantics = [], scalar_prefetch = 0 : i64, scratch_operands = 0 : i64, tpu.core_type = #tpu.core_type<tc>} {
    %c0 = arith.constant 0 : index
    %c0_0 = arith.constant 0 : index
    %0 = vector.load %arg0[%c0, %c0_0] : memref<32x144xf32, #tpu.memory_space<vmem>>, vector<32x144xf32>
    %c0_1 = arith.constant 0 : index
    %c0_2 = arith.constant 0 : index
    %1 = vector.load %arg1[%c0_1, %c0_2] : memref<144x128xf32, #tpu.memory_space<vmem>>, vector<144x128xf32>
    %cst = arith.constant dense<0.000000e+00> : vector<32x128xf32>
    %2 = tpu.matmul %0, %1, %cst {dimension_numbers = #tpu.dot_dimension_numbers<[1], [0], [0], [1], [0, 0, 1, 1], [], []>} : vector<32x144xf32>, vector<144x128xf32>, vector<32x128xf32> -> vector<32x128xf32>
    %c0_3 = arith.constant 0 : index
    %c0_4 = arith.constant 0 : index
    %3 = vector.load %arg2[%c0_3, %c0_4] : memref<1x128xf32, #tpu.memory_space<vmem>>, vector<1x128xf32>
    %4 = vector.broadcast %3 : vector<1x128xf32> to vector<32x128xf32>
    %5 = arith.addf %2, %4 : vector<32x128xf32>
    %c0_5 = arith.constant 0 : index
    %c0_6 = arith.constant 0 : index
    %6 = vector.load %arg3[%c0_5, %c0_6] : memref<32x128xf32, #tpu.memory_space<vmem>>, vector<32x128xf32>
    tpu.vector_store %arg3[%c0_5, %c0_6], %5 {strides = array<i32>} : memref<32x128xf32, #tpu.memory_space<vmem>>, vector<32x128xf32>,
    return
  }
}

</mosaic_0001>

<llo_original>
// kernel: tpu_custom_call.1
$region0: #{tpu_custom_call.1}
  #allocation0 [shape = 'u32[]', space=smem, size = 0x4, offset = 0x4, fixed_abs, tag = 'smem constant byte address 0x4 - core index']
  #allocation1 [shape = 'u32[144,128]{1,0:T(1,128)}', space=vmem, size = 0x12000, scoped, tag = 'internal scratch']
  %s0 = inlined_call_operand.hbm [shape: f32[32,144], index: 0, kind: input, shape index: {}]
  %s1 = inlined_call_operand.hbm [shape: f32[144,128], index: 1, kind: input, shape index: {}]
  %s2 = inlined_call_operand.vmem [shape: f32[1,128], index: 2, kind: input, shape index: {}]
  %s3 = inlined_call_operand.hbm [shape: f32[32,128], index: 3, kind: output, shape index: {}]
  %s4 = sld [smem:[#allocation0]]
  $region30: #{tpu_custom_call.1} parent=0
    _
  %s6 = ssub.s32 1, %s4
  %s7 = scalar_select 0, %s6, %s4
  $region1: #{tpu_custom_call.1} parent=0
    #allocation2 [shape = 'u8[32768]{0}', space=vmem, size = 0x8000, scoped, tag = 'input window, operand 0, single buffered']
    #allocation3 [shape = 's32[1]{0}', space=sflag, size = 0x4, scoped, tag = 'scoped memory for tpu_custom_call.1']
    #allocation4 [shape = 's32[1]{0}', space=sflag, size = 0x4, scoped, tag = 'scoped memory for tpu_custom_call.1']
    #allocation5 [shape = 'u8[73728]{0}', space=vmem, size = 0x12000, scoped, tag = 'input window, operand 1, single buffered']
    #allocation6 [shape = 's32[1]{0}', space=sflag, size = 0x4, scoped, tag = 'scoped memory for tpu_custom_call.1']
    #allocation7 [shape = 'u8[16384]{0}', space=vmem, size = 0x4000, scoped, tag = 'output window, operand 0, single buffered']
    %8 = vsyncpa [#allocation3], 0
    %9 = vsyncpa [#allocation6], 0
    %10 = vsyncpa [#allocation4], 0
    // Predicated region
    $region2: #{tpu_custom_call.1} parent=1 // pred_check
      _
    $region3: #{tpu_custom_call.1} parent=1 // pred_check_branch
      %12 = sbr.rel (0) target = $region5
    $region4: #{tpu_custom_call.1} parent=1 // pred_region
      %s14 = ssub.s32 1024, 1024
      %15 = vsyncadd [#allocation3], %s14
      %s16 = sshll.u32 [#allocation2], 4
      %s17 = int_to_ptr.vmem [resolvable:$true] %s16
      %22 = dma.hbm_to_vmem [thread:$0]  %s0, 1024, %s17, [#allocation3], 256, 256, 16
    $region5: #{tpu_custom_call.1} parent=1 // pred_fallthru
      _
    // Predicated region
    $region6: #{tpu_custom_call.1} parent=1 // pred_check
      _
    $region7: #{tpu_custom_call.1} parent=1 // pred_check_branch
      %24 = sbr.rel (0) target = $region9
    $region8: #{tpu_custom_call.1} parent=1 // pred_region
      %s26 = ssub.s32 2304, 2304
      %27 = vsyncadd [#allocation6], %s26
      %s28 = sshll.u32 [#allocation5], 4
      %s29 = int_to_ptr.vmem [resolvable:$true] %s28
      %34 = dma.hbm_to_vmem [thread:$0]  %s1, 2304, %s29, [#allocation6], 128, 128, 8
    $region9: #{tpu_custom_call.1} parent=1 // pred_fallthru
      _
    // Predicated region
    $region10: #{tpu_custom_call.1} parent=1 // pred_check
      _
    $region11: #{tpu_custom_call.1} parent=1 // pred_check_branch
      %36 = sbr.rel (0) target = $region13
    $region12: #{tpu_custom_call.1} parent=1 // pred_region
      _
    $region13: #{tpu_custom_call.1} parent=1 // pred_fallthru
      _
    // Predicated region
    $region14: #{tpu_custom_call.1} parent=1 // pred_check
      _
    $region15: #{tpu_custom_call.1} parent=1 // pred_check_branch
      %38 = sbr.rel (0) target = $region17
    $region16: #{tpu_custom_call.1} parent=1 // pred_region
      %39 = dma.done [#allocation3], 1024
    $region17: #{tpu_custom_call.1} parent=1 // pred_fallthru
      _
    // Predicated region
    $region18: #{tpu_custom_call.1} parent=1 // pred_check
      _
    $region19: #{tpu_custom_call.1} parent=1 // pred_check_branch
      %41 = sbr.rel (0) target = $region21
    $region20: #{tpu_custom_call.1} parent=1 // pred_region
      %42 = dma.done [#allocation6], 2304
    $region21: #{tpu_custom_call.1} parent=1 // pred_fallthru
      _
    %v43 = vld [vmem:[#allocation2] sm:$0xff]
    %v44 = vld [vmem:[#allocation2 + $0x8] sm:$0xff]
    %v45 = vld [vmem:[#allocation2 + $0x10] sm:$0xff]
    %v46 = vld [vmem:[#allocation2 + $0x18] sm:$0xff]
    %v47 = vld [vmem:[#allocation2 + $0x20] sm:$0xff]
    %v48 = vld [vmem:[#allocation2 + $0x28] sm:$0xff]
    %v49 = vld [vmem:[#allocation2 + $0x30] sm:$0xff]
    %v50 = vld [vmem:[#allocation2 + $0x38] sm:$0xff]
    %v51 = vld [vmem:[#allocation5] sm:$0xff]
    %v52 = vld [vmem:[#allocation5 + $0x8] sm:$0xff]
    %v53 = vld [vmem:[#allocation5 + $0x10] sm:$0xff]
    %v54 = vld [vmem:[#allocation5 + $0x18] sm:$0xff]
    %v55 = vld [vmem:[#allocation5 + $0x20] sm:$0xff]
    %v56 = vld [vmem:[#allocation5 + $0x28] sm:$0xff]
    %v57 = vld [vmem:[#allocation5 + $0x30] sm:$0xff]
    %v58 = vld [vmem:[#allocation5 + $0x38] sm:$0xff]
    %v59 = vld [vmem:[#allocation5 + $0x40] sm:$0xff]
    %v60 = vld [vmem:[#allocation5 + $0x48] sm:$0xff]
    %v61 = vld [vmem:[#allocation5 + $0x50] sm:$0xff]
    %v62 = vld [vmem:[#allocation5 + $0x58] sm:$0xff]
    %v63 = vld [vmem:[#allocation5 + $0x60] sm:$0xff]
    %v64 = vld [vmem:[#allocation5 + $0x68] sm:$0xff]
    %v65 = vld [vmem:[#allocation5 + $0x70] sm:$0xff]
    %v66 = vld [vmem:[#allocation5 + $0x78] sm:$0xff]
    %v67 = vld [vmem:[#allocation5 + $0x80] sm:$0xff]
    %v68 = vld [vmem:[#allocation5 + $0x88] sm:$0xff]
    %v69 = vld [vmem:[%s2] sm:$0x1]
    %v71 = vlaneseq
    %v72 = vshrl.u32 %v71, 7
    %v73 = vsub.s32 0, %v72
    %v74 = vrot.slane %v69, %v73
    %vm76 = vcmask 130048
    %v78 = vsel %vm76, %v44, 0
    %v81 = vsel %vm76, %v46, 0
    %v84 = vsel %vm76, %v48, 0
    %v87 = vsel %vm76, %v50, 0
    %89 = vmatprep.subr.mxu0 0.0
    %90 = vmatpush1.msra.mxu0 %v51
    %91 = vmatprep.subr.mxu0 0.0
    %92 = vmatpush1.msra.mxu0 %v52
    %93 = vmatprep.subr.mxu0 0.0
    %94 = vmatpush1.msra.mxu0 %v53
    %95 = vmatprep.subr.mxu0 0.0
    %96 = vmatpush1.msra.mxu0 %v54
    %97 = vmatprep.subr.mxu0 0.0
    %98 = vmatpush1.msra.mxu0 %v55
    %99 = vmatprep.subr.mxu0 0.0
    %100 = vmatpush1.msra.mxu0 %v56
    %101 = vmatprep.subr.mxu0 0.0
    %102 = vmatpush1.msra.mxu0 %v57
    %103 = vmatprep.subr.mxu0 0.0
    %104 = vmatpush1.msra.mxu0 %v58
    %105 = vmatprep.subr.mxu0 0.0
    %106 = vmatpush1.msra.mxu0 %v59
    %107 = vmatprep.subr.mxu0 0.0
    %108 = vmatpush1.msra.mxu0 %v60
    %109 = vmatprep.subr.mxu0 0.0
    %110 = vmatpush1.msra.mxu0 %v61
    %111 = vmatprep.subr.mxu0 0.0
    %112 = vmatpush1.msra.mxu0 %v62
    %113 = vmatprep.subr.mxu0 0.0
    %114 = vmatpush1.msra.mxu0 %v63
    %115 = vmatprep.subr.mxu0 0.0
    %116 = vmatpush1.msra.mxu0 %v64
    %117 = vmatprep.subr.mxu0 0.0
    %118 = vmatpush1.msra.mxu0 %v65
    %119 = vmatprep.subr.mxu0 0.0
    %120 = vmatpush1.msra.mxu0 %v66
    %121 = vmatprep.subr.mxu0 0.0
    %122 = vmatpush1.msra.mxu0 %v67
    %123 = vmatprep.subr.mxu0 0.0
    %124 = vmatpush1.msra.mxu0 %v68
    %125 = vmatprep.subr.mxu0 0.0
    %126 = vmatpush1.msra.mxu0 0.0
    %127 = vmatprep.subr.mxu0 0.0
    %128 = vmatpush1.msra.mxu0 0.0
    %129 = vmatprep.subr.mxu0 0.0
    %130 = vmatpush1.msra.mxu0 0.0
    %131 = vmatprep.subr.mxu0 0.0
    %132 = vmatpush1.msra.mxu0 0.0
    %133 = vmatprep.subr.mxu0 0.0
    %134 = vmatpush1.msra.mxu0 0.0
    %135 = vmatprep.subr.mxu0 0.0
    %136 = vmatpush1.msra.mxu0 0.0
    %137 = vmatprep.subr.mxu0 0.0
    %138 = vmatpush1.msra.mxu0 0.0
    %139 = vmatprep.subr.mxu0 0.0
    %140 = vmatpush1.msra.mxu0 0.0
    %141 = vmatprep.subr.mxu0 0.0
    %142 = vmatpush1.msra.mxu0 0.0
    %143 = vmatprep.subr.mxu0 0.0
    %144 = vmatpush1.msra.mxu0 0.0
    %145 = vmatprep.subr.mxu0 0.0
    %146 = vmatpush1.msra.mxu0 0.0
    %147 = vmatprep.subr.mxu0 0.0
    %148 = vmatpush1.msra.mxu0 0.0
    %149 = vmatprep.subr.mxu0 0.0
    %150 = vmatpush1.msra.mxu0 0.0
    %151 = vmatprep.subr.mxu0 0.0
    %152 = vmatpush1.msra.mxu0 0.0
    %153 = vmatprep.mubr.f32.mxu0 %v78
    %154 = vmatmul.mubr.f32.gmra.mrb[0].mxu0 %v43
    %v155 = vpop.f32.mrb[0].mxu0
    %v156 = vadd.f32 %v74, %v155
    %v157 = vpop.f32.mrb[0].mxu0
    %158 = vmatprep.mubr.f32.mxu0 %v81
    %159 = vmatmul.mubr.f32.gmra.mrb[0].mxu0 %v45
    %v160 = vpop.f32.mrb[0].mxu0
    %v161 = vadd.f32 %v74, %v160
    %v162 = vpop.f32.mrb[0].mxu0
    %163 = vmatprep.mubr.f32.mxu0 %v84
    %164 = vmatmul.mubr.f32.gmra.mrb[0].mxu0 %v47
    %v165 = vpop.f32.mrb[0].mxu0
    %v166 = vadd.f32 %v74, %v165
    %v167 = vpop.f32.mrb[0].mxu0
    %168 = vmatprep.mubr.f32.mxu0 %v87
    %169 = vmatmul.mubr.f32.gmra.mrb[0].mxu0 %v49
    %v170 = vpop.f32.mrb[0].mxu0
    %v171 = vadd.f32 %v74, %v170
    %v172 = vpop.f32.mrb[0].mxu0
    %173 = vdwg.mxu0
    %174 = vst [vmem:[#allocation7] sm:$0xff] %v156
    %175 = vst [vmem:[#allocation7 + $0x8] sm:$0xff] %v161
    %176 = vst [vmem:[#allocation7 + $0x10] sm:$0xff] %v166
    %177 = vst [vmem:[#allocation7 + $0x18] sm:$0xff] %v171
    // Predicated region
    $region22: #{tpu_custom_call.1} parent=1 // pred_check
      _
    $region23: #{tpu_custom_call.1} parent=1 // pred_check_branch
      %179 = sbr.rel (0) target = $region25
    $region24: #{tpu_custom_call.1} parent=1 // pred_region
      %s181 = ssub.s32 512, 512
      %182 = vsyncadd [#allocation4], %s181
      %s183 = sshll.u32 [#allocation7], 4
      %s184 = int_to_ptr.vmem [resolvable:$true] %s183
      %189 = dma.vmem_to_hbm [thread:$0]  %s184, 512, %s3, [#allocation4], 128, 128, 8
    $region25: #{tpu_custom_call.1} parent=1 // pred_fallthru
      _
    // Predicated region
    $region26: #{tpu_custom_call.1} parent=1 // pred_check
      _
    $region27: #{tpu_custom_call.1} parent=1 // pred_check_branch
      %191 = sbr.rel (0) target = $region29
    $region28: #{tpu_custom_call.1} parent=1 // pred_region
      %192 = dma.done [#allocation4], 512
    $region29: #{tpu_custom_call.1} parent=1 // pred_fallthru
      _
    %193 = vsyncpa [#allocation3], 1
    %194 = vsyncpa [#allocation6], 1
    %195 = vsyncpa [#allocation4], 1

</llo_original>
